<compile_context>
chip_gen: v7x
topology: tpu7x:2x2x1
jax: 0.10.0
libtpu: 0.0.40
codegen_flags: <defaults>
</compile_context>

<pallas_src>
import numpy as np
import jax
import jax.numpy as jnp
from jax.experimental import pallas as pl
from jax.experimental.pallas import tpu as pltpu


def _ceil_div(a, b):
    return (a + b - 1) // b


def _round_up(a, b):
    return _ceil_div(a, b) * b


def _vmem_capacity_bytes():
    """Physical per-core VMEM; conservative 64 MiB fallback (the v7x floor)."""
    try:
        return int(pltpu.get_tpu_info().vmem_capacity_bytes)
    except Exception:
        return 64 * 1024 * 1024


def _build_pool_matrix_and_scale(H, W, hw_pad, sizes, k_pad, w_dtype):
    """0/1 bin-membership matrix (hw_pad, k_pad) in `w_dtype` plus exact f32
    per-column 1/bin_area scale (1, k_pad). Extra rows/columns are zero."""
    mat = np.zeros((hw_pad, k_pad), dtype=np.float32)
    scale = np.ones((1, k_pad), dtype=np.float32)
    col = 0
    for s in sizes:
        for i in range(s):
            h0, h1 = (i * H) // s, _ceil_div((i + 1) * H, s)
            for j in range(s):
                w0, w1 = (j * W) // s, _ceil_div((j + 1) * W, s)
                m = np.zeros((H, W), dtype=np.float32)
                m[h0:h1, w0:w1] = 1.0
                mat[: H * W, col] = m.reshape(-1)
                scale[0, col] = 1.0 / float((h1 - h0) * (w1 - w0))
                col += 1
    return jnp.asarray(mat, dtype=w_dtype), jnp.asarray(scale)


def _build_output_permutation(N, C, k_pad, sizes):
    """Static gather indices turning the (N, C*k_pad) row-major pooled output into
    torch's [Flatten -> cat over sizes] column order (size-major, then channel)."""
    perm = []
    off = 0
    for s in sizes:
        for c in range(C):
            base = c * k_pad + off
            perm.extend(range(base, base + s * s))
        off += s * s
    return jnp.asarray(np.asarray(perm, dtype=np.int32))


def spp_pool_kernel(x_ref, w_ref, scale_ref, o_ref, acc_ref):
    """o[rows, :] = (x[rows, :] @ w01) * scale, accumulated in f32 over the HW axis."""
    k = pl.program_id(1)

    @pl.when(k == 0)
    def _():
        acc_ref[...] = jnp.zeros_like(acc_ref)

    acc_ref[...] += jnp.dot(x_ref[...], w_ref[...],
                            preferred_element_type=jnp.float32)

    @pl.when(k == pl.num_programs(1) - 1)
    def _():
        o_ref[...] = (acc_ref[...] * scale_ref[...]).astype(o_ref.dtype)


def _pick_tiles(nc, hw, k_pad, in_itemsize, out_itemsize, budget):
    """Choose (TM, T_HW, num_k_steps, hw_pad) so the double-buffered working set
    (x tile, weight buffers, out tile, f32 accumulator, scale) fits `budget`."""

    def max_rows(t_hw):
        fixed = 2 * t_hw * k_pad * in_itemsize + 2 * k_pad * 4       # weight bufs + scale
        per_row = (2 * t_hw * in_itemsize        # double-buffered x tile
                   + 2 * k_pad * out_itemsize    # double-buffered out tile
                   + k_pad * 4)                  # f32 accumulator scratch
        return (budget - fixed) // per_row

    if max_rows(hw) >= 8:
        t_hw, hw_pad = hw, hw                    # whole contraction resident (common case)
    else:
        t_hw = 512                               # large H*W: tile the contraction axis
        while t_hw > 128 and max_rows(t_hw) < 8:
            t_hw //= 2
        hw_pad = _round_up(hw, t_hw)
    num_k = hw_pad // t_hw

    tm = max(8, max_rows(t_hw))
    if nc >= 16:                                 # >=2-4 row steps: v7x megacore + DMA overlap
        tm = min(tm, _round_up(_ceil_div(nc, 4), 8))
    if tm >= nc:
        tm = nc
    elif tm >= 128:
        tm = (tm // 128) * 128
    else:
        tm = max(8, (tm // 8) * 8)
    return tm, t_hw, num_k, hw_pad


def spp_module_forward(x, sizes=(1, 2, 3, 6)):
    """Equivalent of SPPModule(pool_mode='avg', sizes).forward(x); x is NCHW."""
    if not jnp.issubdtype(x.dtype, jnp.floating):
        x = x.astype(jnp.float32)
    N, C, H, W = x.shape
    NC, HW = N * C, H * W
    K = sum(s * s for s in sizes)
    K_pad = _round_up(K, 128)                    # lane-dense output stores

    in_itemsize = jnp.dtype(x.dtype).itemsize
    out_dtype = x.dtype                          # write output in input dtype
    out_itemsize = jnp.dtype(out_dtype).itemsize

    vmem_cap = _vmem_capacity_bytes()            # 128 MiB on v5e/v6e, 64 MiB on v7x
    budget = int(vmem_cap * 0.65)
    vmem_limit = int(vmem_cap * 0.75)

    TM, T_HW, num_k, HW_pad = _pick_tiles(NC, HW, K_pad, in_itemsize, out_itemsize, budget)

    pool_mat, scale = _build_pool_matrix_and_scale(H, W, HW_pad, sizes, K_pad, x.dtype)

    x_flat = x.reshape(NC, HW)                   # native dtype: bf16 feeds the MXU directly
    if HW_pad != HW:
        x_flat = jnp.pad(x_flat, ((0, 0), (0, HW_pad - HW)))

    grid = (pl.cdiv(NC, TM), num_k)

    cost = pl.CostEstimate(
        flops=2 * NC * HW * K,                   # real K, not the lane padding
        transcendentals=0,
        bytes_accessed=(NC * HW * in_itemsize
                        + HW_pad * K_pad * in_itemsize
                        + NC * K_pad * out_itemsize),
    )

    pooled = pl.pallas_call(
        spp_pool_kernel,
        out_shape=jax.ShapeDtypeStruct((NC, K_pad), out_dtype),
        grid=grid,
        in_specs=[
            pl.BlockSpec((TM, T_HW), lambda i, k: (i, k)),      # row tile, double-buffered
            pl.BlockSpec((T_HW, K_pad), lambda i, k: (k, 0)),   # 0/1 pooling matrix tile
            pl.BlockSpec((1, K_pad), lambda i, k: (0, 0)),      # f32 1/area column scale
        ],
        out_specs=pl.BlockSpec((TM, K_pad), lambda i, k: (i, 0)),
        scratch_shapes=[pltpu.VMEM((TM, K_pad), jnp.float32)],  # f32 accumulator
        compiler_params=pltpu.CompilerParams(
            dimension_semantics=("parallel", "arbitrary"),      # rows sharded, HW reduced
            vmem_limit_bytes=vmem_limit,
        ),
        cost_estimate=cost,
    )(x_flat, pool_mat, scale)

    # Glue: one static gather reproducing nn.Flatten + torch.cat(dim=1) ordering,
    # then x.view(N, C_total, 1, 1).
    perm = _build_output_permutation(N, C, K_pad, sizes)
    y = jnp.take(pooled.reshape(N, C * K_pad), perm, axis=1)    # (N, C*K)
    return y.reshape(N, C * K, 1, 1)


def _reference_adaptive_avg_spp(x, sizes=(1, 2, 3, 6)):
    """Pure-JAX reference (explicit slicing) for correctness check."""
    N, C, H, W = x.shape
    outs = []
    for s in sizes:
        rows = []
        for i in range(s):
            h0, h1 = (i * H) // s, _ceil_div((i + 1) * H, s)
            cols = []
            for j in range(s):
                w0, w1 = (j * W) // s, _ceil_div((j + 1) * W, s)
                cols.append(jnp.mean(x[:, :, h0:h1, w0:w1], axis=(2, 3)))
            rows.append(jnp.stack(cols, axis=-1))            # (N, C, s)
        pooled = jnp.stack(rows, axis=-2)                    # (N, C, s, s)
        outs.append(pooled.reshape(N, C * s * s))
    y = jnp.concatenate(outs, axis=1)
    return y.reshape(N, y.shape[1], 1, 1)


if __name__ == "__main__":
    key = jax.random.PRNGKey(0)
    N, C, H, W = 2, 4, 16, 16
    x = jax.random.normal(key, (N, C, H, W), dtype=jnp.float32)

    out = jax.block_until_ready(spp_module_forward(x))
    # Expected shape: (N, C * (1 + 4 + 9 + 36), 1, 1) = (2, 200, 1, 1)
    assert out.shape == (N, C * 50, 1, 1), out.shape
    ref = jax.block_until_ready(_reference_adaptive_avg_spp(x))
    assert jnp.allclose(out, ref, atol=1e-5, rtol=1e-5), "f32 mismatch"

    # bf16 path: native-dtype MXU feed + bf16 output store (rounding only at the end).
    xb = x.astype(jnp.bfloat16)
    out_b = jax.block_until_ready(spp_module_forward(xb))
    assert out_b.dtype == jnp.bfloat16 and out_b.shape == (N, C * 50, 1, 1)
    ref_b = _reference_adaptive_avg_spp(xb.astype(jnp.float32))
    assert jnp.allclose(out_b.astype(jnp.float32), ref_b, atol=2e-2, rtol=2e-2), "bf16 mismatch"

    print("KERNEL_OK")
</pallas_src>

<mosaic_0001>
module attributes {stable_mosaic.version = 11 : i64} {
  func.func @spp_pool_kernel(%arg0: i32, %arg1: i32, %arg2: memref<8x256xf32, #tpu.memory_space<vmem>>, %arg3: memref<256x128xf32, #tpu.memory_space<vmem>>, %arg4: memref<1x128xf32, #tpu.memory_space<vmem>>, %arg5: memref<8x128xf32, #tpu.memory_space<vmem>>, %arg6: memref<8x128xf32, #tpu.memory_space<vmem>>) attributes {dimension_semantics = [#tpu.dimension_semantics<parallel>, #tpu.dimension_semantics<arbitrary>], iteration_bounds = array<i64: 1, 1>, scalar_prefetch = 0 : i64, scratch_operands = 1 : i64, tpu.core_type = #tpu.core_type<tc>, window_params = [{transform_indices = @transform_0, window_bounds = array<i64: 8, 256>}, {transform_indices = @transform_1, window_bounds = array<i64: 256, 128>}, {pipeline_mode = #tpu.pipeline_mode<synchronous>, transform_indices = @transform_2, window_bounds = array<i64: 1, 128>}, {transform_indices = @transform_3, window_bounds = array<i64: 8, 128>}]} {
    %c0_i32 = arith.constant 0 : i32
    %0 = arith.cmpi eq, %arg1, %c0_i32 : i32
    %1 = arith.extui %0 : i1 to i32
    %c0_i32_0 = arith.constant 0 : i32
    %2 = arith.cmpi ne, %1, %c0_i32_0 : i32
    scf.if %2 {
      %cst_10 = arith.constant 0.000000e+00 : f32
      %12 = vector.broadcast %cst_10 : f32 to vector<8x128xf32>
      %c0_11 = arith.constant 0 : index
      %c0_12 = arith.constant 0 : index
      %13 = vector.load %arg6[%c0_11, %c0_12] : memref<8x128xf32, #tpu.memory_space<vmem>>, vector<8x128xf32>
      tpu.vector_store %arg6[%c0_11, %c0_12], %12 {strides = array<i32>} : memref<8x128xf32, #tpu.memory_space<vmem>>, vector<8x128xf32>,
    } else {
    }
    %c0 = arith.constant 0 : index
    %c0_1 = arith.constant 0 : index
    %3 = vector.load %arg6[%c0, %c0_1] : memref<8x128xf32, #tpu.memory_space<vmem>>, vector<8x128xf32>
    %c0_2 = arith.constant 0 : index
    %c0_3 = arith.constant 0 : index
    %4 = vector.load %arg2[%c0_2, %c0_3] : memref<8x256xf32, #tpu.memory_space<vmem>>, vector<8x256xf32>
    %c0_4 = arith.constant 0 : index
    %c0_5 = arith.constant 0 : index
    %5 = vector.load %arg3[%c0_4, %c0_5] : memref<256x128xf32, #tpu.memory_space<vmem>>, vector<256x128xf32>
    %cst = arith.constant dense<0.000000e+00> : vector<8x128xf32>
    %6 = tpu.matmul %4, %5, %cst {dimension_numbers = #tpu.dot_dimension_numbers<[1], [0], [0], [1], [0, 0, 1, 1], [], []>} : vector<8x256xf32>, vector<256x128xf32>, vector<8x128xf32> -> vector<8x128xf32>
    %7 = arith.addf %3, %6 : vector<8x128xf32>
    %c0_6 = arith.constant 0 : index
    %c0_7 = arith.constant 0 : index
    %8 = vector.load %arg6[%c0_6, %c0_7] : memref<8x128xf32, #tpu.memory_space<vmem>>, vector<8x128xf32>
    tpu.vector_store %arg6[%c0_6, %c0_7], %7 {strides = array<i32>} : memref<8x128xf32, #tpu.memory_space<vmem>>, vector<8x128xf32>,
    %c0_i32_8 = arith.constant 0 : i32
    %9 = arith.cmpi eq, %arg1, %c0_i32_8 : i32
    %10 = arith.extui %9 : i1 to i32
    %c0_i32_9 = arith.constant 0 : i32
    %11 = arith.cmpi ne, %10, %c0_i32_9 : i32
    scf.if %11 {
      %c0_10 = arith.constant 0 : index
      %c0_11 = arith.constant 0 : index
      %12 = vector.load %arg6[%c0_10, %c0_11] : memref<8x128xf32, #tpu.memory_space<vmem>>, vector<8x128xf32>
      %c0_12 = arith.constant 0 : index
      %c0_13 = arith.constant 0 : index
      %13 = vector.load %arg4[%c0_12, %c0_13] : memref<1x128xf32, #tpu.memory_space<vmem>>, vector<1x128xf32>
      %14 = vector.broadcast %13 : vector<1x128xf32> to vector<8x128xf32>
      %15 = arith.mulf %12, %14 : vector<8x128xf32>
      %c0_14 = arith.constant 0 : index
      %c0_15 = arith.constant 0 : index
      %16 = vector.load %arg5[%c0_14, %c0_15] : memref<8x128xf32, #tpu.memory_space<vmem>>, vector<8x128xf32>
      tpu.vector_store %arg5[%c0_14, %c0_15], %15 {strides = array<i32>} : memref<8x128xf32, #tpu.memory_space<vmem>>, vector<8x128xf32>,
    } else {
    }
    return
  }
  func.func @transform_0(%arg0: i32, %arg1: i32) -> (i32, i32) {
    %c0_i32 = arith.constant 0 : i32
    return %arg0, %arg1 : i32, i32
  }
  func.func @transform_1(%arg0: i32, %arg1: i32) -> (i32, i32) {
    %c0_i32 = arith.constant 0 : i32
    %c0_i32_0 = arith.constant 0 : i32
    return %arg1, %c0_i32 : i32, i32
  }
  func.func @transform_2(%arg0: i32, %arg1: i32) -> (i32, i32) {
    %c0_i32 = arith.constant 0 : i32
    %c0_i32_0 = arith.constant 0 : i32
    %c0_i32_1 = arith.constant 0 : i32
    return %c0_i32, %c0_i32_0 : i32, i32
  }
  func.func @transform_3(%arg0: i32, %arg1: i32) -> (i32, i32) {
    %c0_i32 = arith.constant 0 : i32
    %c0_i32_0 = arith.constant 0 : i32
    return %arg0, %c0_i32 : i32, i32
  }
}

</mosaic_0001>

<llo_original>
// kernel: tpu_custom_call.1
$region0: #{tpu_custom_call.1}
  #allocation0 [shape = 'u32[]', space=smem, size = 0x4, offset = 0x4, fixed_abs, tag = 'smem constant byte address 0x4 - core index']
  #allocation1 [shape = 'u32[144,128]{1,0:T(1,128)}', space=vmem, size = 0x12000, scoped, tag = 'internal scratch']
  #allocation2 [shape = 'f32[8,128]{1,0:T(8,128)}', space=vmem, size = 0x1000, scoped, tag = 'scratch operand']
  %s0 = inlined_call_operand.hbm [shape: f32[8,256], index: 0, kind: input, shape index: {}]
  %s1 = inlined_call_operand.hbm [shape: f32[256,128], index: 1, kind: input, shape index: {}]
  %s2 = inlined_call_operand.vmem [shape: f32[1,128], index: 2, kind: input, shape index: {}]
  %s3 = inlined_call_operand.hbm [shape: f32[8,128], index: 3, kind: output, shape index: {}]
  %s4 = sld [smem:[#allocation0]]
  $region38: #{tpu_custom_call.1} parent=0
    _
  %s6 = ssub.s32 1, %s4
  %s7 = scalar_select 0, %s6, %s4
  $region1: #{tpu_custom_call.1} parent=0
    #allocation3 [shape = 'u8[8192]{0}', space=vmem, size = 0x2000, scoped, tag = 'input window, operand 0, single buffered']
    #allocation4 [shape = 's32[1]{0}', space=sflag, size = 0x4, scoped, tag = 'scoped memory for tpu_custom_call.1']
    #allocation5 [shape = 's32[1]{0}', space=sflag, size = 0x4, scoped, tag = 'scoped memory for tpu_custom_call.1']
    #allocation6 [shape = 'u8[131072]{0}', space=vmem, size = 0x20000, scoped, tag = 'input window, operand 1, single buffered']
    #allocation7 [shape = 's32[1]{0}', space=sflag, size = 0x4, scoped, tag = 'scoped memory for tpu_custom_call.1']
    #allocation8 [shape = 'u8[4096]{0}', space=vmem, size = 0x1000, scoped, tag = 'output window, operand 0, single buffered']
    %8 = vsyncpa [#allocation4], 0
    %9 = vsyncpa [#allocation7], 0
    %10 = vsyncpa [#allocation5], 0
    // Predicated region
    $region2: #{tpu_custom_call.1} parent=1 // pred_check
      _
    $region3: #{tpu_custom_call.1} parent=1 // pred_check_branch
      %12 = sbr.rel (0) target = $region5
    $region4: #{tpu_custom_call.1} parent=1 // pred_region
      %s14 = ssub.s32 256, 256
      %15 = vsyncadd [#allocation4], %s14
      %s17 = sshll.u32 [#allocation3], 4
      %s18 = int_to_ptr.vmem [resolvable:$true] %s17
      %20 = dma.hbm_to_vmem [thread:$0]  %s0, 256, %s18, [#allocation4]
    $region5: #{tpu_custom_call.1} parent=1 // pred_fallthru
      _
    // Predicated region
    $region6: #{tpu_custom_call.1} parent=1 // pred_check
      _
    $region7: #{tpu_custom_call.1} parent=1 // pred_check_branch
      %22 = sbr.rel (0) target = $region9
    $region8: #{tpu_custom_call.1} parent=1 // pred_region
      %s24 = ssub.s32 4096, 4096
      %25 = vsyncadd [#allocation7], %s24
      %s26 = sshll.u32 [#allocation6], 4
      %s27 = int_to_ptr.vmem [resolvable:$true] %s26
      %32 = dma.hbm_to_vmem [thread:$0]  %s1, 4096, %s27, [#allocation7], 128, 128, 8
    $region9: #{tpu_custom_call.1} parent=1 // pred_fallthru
      _
    // Predicated region
    $region10: #{tpu_custom_call.1} parent=1 // pred_check
      _
    $region11: #{tpu_custom_call.1} parent=1 // pred_check_branch
      %34 = sbr.rel (0) target = $region13
    $region12: #{tpu_custom_call.1} parent=1 // pred_region
      _
    $region13: #{tpu_custom_call.1} parent=1 // pred_fallthru
      _
    // Predicated region
    $region14: #{tpu_custom_call.1} parent=1 // pred_check
      _
    $region15: #{tpu_custom_call.1} parent=1 // pred_check_branch
      %36 = sbr.rel (0) target = $region17
    $region16: #{tpu_custom_call.1} parent=1 // pred_region
      %37 = dma.done [#allocation4], 256
    $region17: #{tpu_custom_call.1} parent=1 // pred_fallthru
      _
    // Predicated region
    $region18: #{tpu_custom_call.1} parent=1 // pred_check
      _
    $region19: #{tpu_custom_call.1} parent=1 // pred_check_branch
      %39 = sbr.rel (0) target = $region21
    $region20: #{tpu_custom_call.1} parent=1 // pred_region
      %40 = dma.done [#allocation7], 4096
    $region21: #{tpu_custom_call.1} parent=1 // pred_fallthru
      _
    %p41 = scmp.eq.s32.totalorder 0, 0
    // Predicated region
    $region22: #{tpu_custom_call.1} parent=1 // pred_check
      %p42 = pneg %p41
    $region23: #{tpu_custom_call.1} parent=1 // pred_check_branch
      %44 = sbr.rel (%p42) target = $region25
    $region24: #{tpu_custom_call.1} parent=1 // pred_region
      %45 = vst [vmem:[#allocation2] sm:$0xff] 0.0
    $region25: #{tpu_custom_call.1} parent=1 // pred_fallthru
      _
    %v46 = vld [vmem:[#allocation2] sm:$0xff]
    %v47 = vld [vmem:[#allocation3] sm:$0xff]
    %v48 = vld [vmem:[#allocation3 + $0x8] sm:$0xff]
    %v49 = vld [vmem:[#allocation6] sm:$0xff]
    %v50 = vld [vmem:[#allocation6 + $0x8] sm:$0xff]
    %v51 = vld [vmem:[#allocation6 + $0x10] sm:$0xff]
    %v52 = vld [vmem:[#allocation6 + $0x18] sm:$0xff]
    %v53 = vld [vmem:[#allocation6 + $0x20] sm:$0xff]
    %v54 = vld [vmem:[#allocation6 + $0x28] sm:$0xff]
    %v55 = vld [vmem:[#allocation6 + $0x30] sm:$0xff]
    %v56 = vld [vmem:[#allocation6 + $0x38] sm:$0xff]
    %v57 = vld [vmem:[#allocation6 + $0x40] sm:$0xff]
    %v58 = vld [vmem:[#allocation6 + $0x48] sm:$0xff]
    %v59 = vld [vmem:[#allocation6 + $0x50] sm:$0xff]
    %v60 = vld [vmem:[#allocation6 + $0x58] sm:$0xff]
    %v61 = vld [vmem:[#allocation6 + $0x60] sm:$0xff]
    %v62 = vld [vmem:[#allocation6 + $0x68] sm:$0xff]
    %v63 = vld [vmem:[#allocation6 + $0x70] sm:$0xff]
    %v64 = vld [vmem:[#allocation6 + $0x78] sm:$0xff]
    %v65 = vld [vmem:[#allocation6 + $0x80] sm:$0xff]
    %v66 = vld [vmem:[#allocation6 + $0x88] sm:$0xff]
    %v67 = vld [vmem:[#allocation6 + $0x90] sm:$0xff]
    %v68 = vld [vmem:[#allocation6 + $0x98] sm:$0xff]
    %v69 = vld [vmem:[#allocation6 + $0xa0] sm:$0xff]
    %v70 = vld [vmem:[#allocation6 + $0xa8] sm:$0xff]
    %v71 = vld [vmem:[#allocation6 + $0xb0] sm:$0xff]
    %v72 = vld [vmem:[#allocation6 + $0xb8] sm:$0xff]
    %v73 = vld [vmem:[#allocation6 + $0xc0] sm:$0xff]
    %v74 = vld [vmem:[#allocation6 + $0xc8] sm:$0xff]
    %v75 = vld [vmem:[#allocation6 + $0xd0] sm:$0xff]
    %v76 = vld [vmem:[#allocation6 + $0xd8] sm:$0xff]
    %v77 = vld [vmem:[#allocation6 + $0xe0] sm:$0xff]
    %v78 = vld [vmem:[#allocation6 + $0xe8] sm:$0xff]
    %v79 = vld [vmem:[#allocation6 + $0xf0] sm:$0xff]
    %v80 = vld [vmem:[#allocation6 + $0xf8] sm:$0xff]
    %81 = vmatprep.subr.mxu0 0.0
    %82 = vmatpush1.msra.mxu0 %v49
    %83 = vmatprep.subr.mxu0 0.0
    %84 = vmatpush1.msra.mxu0 %v50
    %85 = vmatprep.subr.mxu0 0.0
    %86 = vmatpush1.msra.mxu0 %v51
    %87 = vmatprep.subr.mxu0 0.0
    %88 = vmatpush1.msra.mxu0 %v52
    %89 = vmatprep.subr.mxu0 0.0
    %90 = vmatpush1.msra.mxu0 %v53
    %91 = vmatprep.subr.mxu0 0.0
    %92 = vmatpush1.msra.mxu0 %v54
    %93 = vmatprep.subr.mxu0 0.0
    %94 = vmatpush1.msra.mxu0 %v55
    %95 = vmatprep.subr.mxu0 0.0
    %96 = vmatpush1.msra.mxu0 %v56
    %97 = vmatprep.subr.mxu0 0.0
    %98 = vmatpush1.msra.mxu0 %v57
    %99 = vmatprep.subr.mxu0 0.0
    %100 = vmatpush1.msra.mxu0 %v58
    %101 = vmatprep.subr.mxu0 0.0
    %102 = vmatpush1.msra.mxu0 %v59
    %103 = vmatprep.subr.mxu0 0.0
    %104 = vmatpush1.msra.mxu0 %v60
    %105 = vmatprep.subr.mxu0 0.0
    %106 = vmatpush1.msra.mxu0 %v61
    %107 = vmatprep.subr.mxu0 0.0
    %108 = vmatpush1.msra.mxu0 %v62
    %109 = vmatprep.subr.mxu0 0.0
    %110 = vmatpush1.msra.mxu0 %v63
    %111 = vmatprep.subr.mxu0 0.0
    %112 = vmatpush1.msra.mxu0 %v64
    %113 = vmatprep.subr.mxu0 0.0
    %114 = vmatpush1.msra.mxu0 %v65
    %115 = vmatprep.subr.mxu0 0.0
    %116 = vmatpush1.msra.mxu0 %v66
    %117 = vmatprep.subr.mxu0 0.0
    %118 = vmatpush1.msra.mxu0 %v67
    %119 = vmatprep.subr.mxu0 0.0
    %120 = vmatpush1.msra.mxu0 %v68
    %121 = vmatprep.subr.mxu0 0.0
    %122 = vmatpush1.msra.mxu0 %v69
    %123 = vmatprep.subr.mxu0 0.0
    %124 = vmatpush1.msra.mxu0 %v70
    %125 = vmatprep.subr.mxu0 0.0
    %126 = vmatpush1.msra.mxu0 %v71
    %127 = vmatprep.subr.mxu0 0.0
    %128 = vmatpush1.msra.mxu0 %v72
    %129 = vmatprep.subr.mxu0 0.0
    %130 = vmatpush1.msra.mxu0 %v73
    %131 = vmatprep.subr.mxu0 0.0
    %132 = vmatpush1.msra.mxu0 %v74
    %133 = vmatprep.subr.mxu0 0.0
    %134 = vmatpush1.msra.mxu0 %v75
    %135 = vmatprep.subr.mxu0 0.0
    %136 = vmatpush1.msra.mxu0 %v76
    %137 = vmatprep.subr.mxu0 0.0
    %138 = vmatpush1.msra.mxu0 %v77
    %139 = vmatprep.subr.mxu0 0.0
    %140 = vmatpush1.msra.mxu0 %v78
    %141 = vmatprep.subr.mxu0 0.0
    %142 = vmatpush1.msra.mxu0 %v79
    %143 = vmatprep.subr.mxu0 0.0
    %144 = vmatpush1.msra.mxu0 %v80
    %145 = vmatprep.mubr.f32.mxu0 %v48
    %146 = vmatmul.mubr.f32.gmra.mrb[0].mxu0 %v47
    %v147 = vpop.f32.mrb[0].mxu0
    %v148 = vadd.f32 0.0, %v147
    %v149 = vpop.f32.mrb[0].mxu0
    %150 = vdwg.mxu0
    %v151 = vadd.f32 %v46, %v148
    %152 = vst [vmem:[#allocation2] sm:$0xff] %v151
    // Predicated region
    $region26: #{tpu_custom_call.1} parent=1 // pred_check
      %p153 = pneg %p41
    $region27: #{tpu_custom_call.1} parent=1 // pred_check_branch
      %155 = sbr.rel (%p153) target = $region29
    $region28: #{tpu_custom_call.1} parent=1 // pred_region
      %v156 = vld [vmem:[#allocation2] sm:$0xff]
      %v157 = vld [vmem:[%s2] sm:$0x1]
      %v159 = vlaneseq
      %v160 = vshrl.u32 %v159, 7
      %v161 = vsub.s32 0, %v160
      %v162 = vrot.slane %v157, %v161
      %v164 = vmul.f32 %v156, %v162
      %165 = vst [vmem:[#allocation8] sm:$0xff] %v164
    $region29: #{tpu_custom_call.1} parent=1 // pred_fallthru
      _
    // Predicated region
    $region30: #{tpu_custom_call.1} parent=1 // pred_check
      _
    $region31: #{tpu_custom_call.1} parent=1 // pred_check_branch
      %167 = sbr.rel (0) target = $region33
    $region32: #{tpu_custom_call.1} parent=1 // pred_region
      %s169 = ssub.s32 128, 128
      %170 = vsyncadd [#allocation5], %s169
      %s172 = sshll.u32 [#allocation8], 4
      %s173 = int_to_ptr.vmem [resolvable:$true] %s172
      %175 = dma.vmem_to_hbm [thread:$0]  %s173, 128, %s3, [#allocation5]
    $region33: #{tpu_custom_call.1} parent=1 // pred_fallthru
      _
    // Predicated region
    $region34: #{tpu_custom_call.1} parent=1 // pred_check
      _
    $region35: #{tpu_custom_call.1} parent=1 // pred_check_branch
      %177 = sbr.rel (0) target = $region37
    $region36: #{tpu_custom_call.1} parent=1 // pred_region
      %178 = dma.done [#allocation5], 128
    $region37: #{tpu_custom_call.1} parent=1 // pred_fallthru
      _
    %179 = vsyncpa [#allocation4], 1
    %180 = vsyncpa [#allocation7], 1
    %181 = vsyncpa [#allocation5], 1

</llo_original>
